<compile_context>
chip_gen: v7x
topology: tpu7x:2x2x1
jax: 0.10.0
libtpu: 0.0.40
codegen_flags: <defaults>
</compile_context>

<pallas_src>
import functools

import jax
import jax.numpy as jnp
from jax.experimental import pallas as pl
from jax.experimental.pallas import tpu as pltpu


def _layernorm_kernel(x_ref, alpha_ref, beta_ref, o_ref, *, eps, hidden):
    # x_ref: (tile_rows, H) block in VMEM; alpha/beta: (1, H) f32, resident.
    x = x_ref[...].astype(jnp.float32)

    # Two-pass mean / unbiased variance (torch.std default: N-1 divisor).
    mean = jnp.mean(x, axis=-1, keepdims=True)
    centered = x - mean
    denom = jnp.float32(max(hidden - 1, 1))  # guard H == 1
    var = jnp.sum(centered * centered, axis=-1, keepdims=True) / denom

    inv = jax.lax.rsqrt(var + jnp.float32(eps))
    out = alpha_ref[...] * (centered * inv) + beta_ref[...]
    o_ref[...] = out.astype(o_ref.dtype)


def _sublane_multiple(dtype):
    itemsize = jnp.dtype(dtype).itemsize
    return {4: 8, 2: 16, 1: 32}.get(itemsize, 8)


def _round_to_sublane(v, sublane):
    return max(sublane, (v // sublane) * sublane)


def _choose_tiling(rows, hidden, dtype):
    """Pick (tile_rows, vmem_limit_bytes) for a streaming, HBM-bound LN."""
    itemsize = jnp.dtype(dtype).itemsize
    sublane = _sublane_multiple(dtype)

    try:
        vmem_capacity = int(pltpu.get_tpu_info().vmem_capacity_bytes)
    except Exception:
        vmem_capacity = 64 * 1024 * 1024  # conservative (v7x-sized) fallback

    # Per-row live VMEM: double-buffered input + output blocks (x's dtype)
    # plus ~2 f32 temporaries live at a time.
    bytes_per_row = hidden * (4 * itemsize + 2 * 4)
    budget = int(0.6 * vmem_capacity)
    max_tile = max(sublane, budget // max(bytes_per_row, 1))

    # Byte-based target: ~8 MiB per input block amortizes the ~0.35 us/step
    # grid overhead on all generations without exceeding the VMEM budget.
    target_block_bytes = 8 * 1024 * 1024
    target_rows = max(sublane, target_block_bytes // max(hidden * itemsize, 1))
    tile = _round_to_sublane(min(target_rows, max_tile), sublane)

    # No point in a block bigger than the (sublane-rounded) data itself.
    tile = min(tile, _round_to_sublane(((rows + sublane - 1) // sublane) * sublane,
                                       sublane))
    tile = _round_to_sublane(tile, sublane)

    # Deepen the grid for per-core pipelining / megacore balance (v7x has two
    # TensorCores sharding the "parallel" axis), but never shrink blocks below
    # ~2 MiB so v5e/v6e keep their DMA efficiency.
    target_steps = 8
    min_split_rows = _round_to_sublane(
        max(sublane, (2 * 1024 * 1024) // max(hidden * itemsize, 1)), sublane)
    if rows >= target_steps * min_split_rows and pl.cdiv(rows, tile) < target_steps:
        tile = max(min_split_rows, _round_to_sublane(rows // target_steps, sublane))

    # Explicit scoped-VMEM limit so big tiles aren't capped by the default.
    footprint = 2 * 2 * tile * hidden * itemsize + 4 * tile * hidden * 4
    vmem_limit = min(max(footprint, 32 * 1024 * 1024),
                     int(0.85 * vmem_capacity),
                     128 * 1024 * 1024)
    return tile, int(vmem_limit)


def layer_norm(x, alpha, beta, *, eps=1e-6, tile_rows=None):
    """x: (B, T, H) float array; alpha, beta: (H,)."""
    B, T, H = x.shape
    rows = B * T
    x2 = x.reshape(rows, H)

    # Pre-cast params to the compute dtype once, in the wrapper.
    alpha2 = alpha.reshape(1, H).astype(jnp.float32)
    beta2 = beta.reshape(1, H).astype(jnp.float32)

    auto_tile, vmem_limit = _choose_tiling(rows, H, x.dtype)
    sublane = _sublane_multiple(x.dtype)
    if tile_rows is None:
        tile_rows = auto_tile
    else:
        tile_rows = _round_to_sublane(tile_rows, sublane)

    # No padding / slicing: Pallas masks the partial last block; LN rows are
    # independent so the padded (undefined) tail rows never affect valid rows.
    grid = (pl.cdiv(rows, tile_rows),)
    kernel = functools.partial(_layernorm_kernel, eps=eps, hidden=H)

    out = pl.pallas_call(
        kernel,
        out_shape=jax.ShapeDtypeStruct((rows, H), x.dtype),
        grid_spec=pltpu.PrefetchScalarGridSpec(
            num_scalar_prefetch=0,
            grid=grid,
            in_specs=[
                pl.BlockSpec((tile_rows, H), lambda i: (i, 0)),
                pl.BlockSpec((1, H), lambda i: (0, 0)),
                pl.BlockSpec((1, H), lambda i: (0, 0)),
            ],
            out_specs=pl.BlockSpec((tile_rows, H), lambda i: (i, 0)),
        ),
        compiler_params=pltpu.CompilerParams(
            dimension_semantics=("parallel",),
            vmem_limit_bytes=vmem_limit,
        ),
    )(x2, alpha2, beta2)

    return out.reshape(B, T, H)


def layer_norm_ref(x, alpha, beta, eps=1e-6):
    """Pure-JAX reference matching the PyTorch forward."""
    x32 = x.astype(jnp.float32)
    mean = jnp.mean(x32, axis=-1, keepdims=True)
    var = jnp.sum((x32 - mean) ** 2, axis=-1, keepdims=True) / max(x.shape[-1] - 1, 1)
    return (alpha * (x32 - mean) / jnp.sqrt(var + eps) + beta).astype(x.dtype)


if __name__ == "__main__":
    B, T, H = 2, 8, 32
    key = jax.random.PRNGKey(0)
    x = jax.random.normal(key, (B, T, H), dtype=jnp.float32)

    # nn.Parameter(torch.ones(H)) / torch.zeros(H) (module's `torch.zero` is a typo).
    alpha = jnp.ones((H,), dtype=jnp.float32)
    beta = jnp.zeros((H,), dtype=jnp.float32)

    out = layer_norm(x, alpha, beta, eps=1e-6)
    out = jax.block_until_ready(out)

    ref = layer_norm_ref(x, alpha, beta, eps=1e-6)
    assert out.shape == (B, T, H)
    assert jnp.allclose(out, ref, atol=1e-5, rtol=1e-5), "mismatch vs reference"

    print("KERNEL_OK")
</pallas_src>

<mosaic_0001>
module attributes {stable_mosaic.version = 11 : i64} {
  func.func @_layernorm_kernel(%arg0: i32, %arg1: memref<16x32xf32, #tpu.memory_space<vmem>>, %arg2: memref<1x32xf32, #tpu.memory_space<vmem>>, %arg3: memref<1x32xf32, #tpu.memory_space<vmem>>, %arg4: memref<16x32xf32, #tpu.memory_space<vmem>>) attributes {dimension_semantics = [#tpu.dimension_semantics<parallel>], iteration_bounds = array<i64: 1>, scalar_prefetch = 0 : i64, scratch_operands = 0 : i64, tpu.core_type = #tpu.core_type<tc>, window_params = [{transform_indices = @transform_0, window_bounds = array<i64: 16, 32>}, {pipeline_mode = #tpu.pipeline_mode<synchronous>, transform_indices = @transform_1, window_bounds = array<i64: 1, 32>}, {pipeline_mode = #tpu.pipeline_mode<synchronous>, transform_indices = @transform_2, window_bounds = array<i64: 1, 32>}, {transform_indices = @transform_3, window_bounds = array<i64: 16, 32>}]} {
    %c0 = arith.constant 0 : index
    %c0_0 = arith.constant 0 : index
    %0 = vector.load %arg1[%c0, %c0_0] : memref<16x32xf32, #tpu.memory_space<vmem>>, vector<16x32xf32>
    %cst = arith.constant dense<0.000000e+00> : vector<16xf32>
    %1 = vector.multi_reduction <add>, %0, %cst [1] : vector<16x32xf32> to vector<16xf32>
    %2 = vector.shape_cast %1 : vector<16xf32> to vector<16x1xf32>
    %cst_1 = arith.constant 3.200000e+01 : f32
    %3 = vector.broadcast %cst_1 : f32 to vector<16x1xf32>
    %4 = arith.divf %2, %3 : vector<16x1xf32>
    %5 = vector.broadcast %4 : vector<16x1xf32> to vector<16x32xf32>
    %6 = arith.subf %0, %5 : vector<16x32xf32>
    %7 = arith.mulf %6, %6 : vector<16x32xf32>
    %cst_2 = arith.constant dense<0.000000e+00> : vector<16xf32>
    %8 = vector.multi_reduction <add>, %7, %cst_2 [1] : vector<16x32xf32> to vector<16xf32>
    %9 = vector.shape_cast %8 : vector<16xf32> to vector<16x1xf32>
    %cst_3 = arith.constant 3.100000e+01 : f32
    %10 = vector.broadcast %cst_3 : f32 to vector<16x1xf32>
    %11 = arith.divf %9, %10 : vector<16x1xf32>
    %cst_4 = arith.constant 9.99999997E-7 : f32
    %12 = vector.broadcast %cst_4 : f32 to vector<16x1xf32>
    %13 = arith.addf %11, %12 : vector<16x1xf32>
    %14 = math.rsqrt %13 : vector<16x1xf32>
    %c0_5 = arith.constant 0 : index
    %c0_6 = arith.constant 0 : index
    %15 = vector.load %arg2[%c0_5, %c0_6] : memref<1x32xf32, #tpu.memory_space<vmem>>, vector<1x32xf32>
    %16 = vector.broadcast %14 : vector<16x1xf32> to vector<16x32xf32>
    %17 = arith.mulf %6, %16 : vector<16x32xf32>
    %18 = vector.broadcast %15 : vector<1x32xf32> to vector<16x32xf32>
    %19 = arith.mulf %18, %17 : vector<16x32xf32>
    %c0_7 = arith.constant 0 : index
    %c0_8 = arith.constant 0 : index
    %20 = vector.load %arg3[%c0_7, %c0_8] : memref<1x32xf32, #tpu.memory_space<vmem>>, vector<1x32xf32>
    %21 = vector.broadcast %20 : vector<1x32xf32> to vector<16x32xf32>
    %22 = arith.addf %19, %21 : vector<16x32xf32>
    %c0_9 = arith.constant 0 : index
    %c0_10 = arith.constant 0 : index
    %23 = vector.load %arg4[%c0_9, %c0_10] : memref<16x32xf32, #tpu.memory_space<vmem>>, vector<16x32xf32>
    tpu.vector_store %arg4[%c0_9, %c0_10], %22 {strides = array<i32>} : memref<16x32xf32, #tpu.memory_space<vmem>>, vector<16x32xf32>,
    return
  }
  func.func @transform_0(%arg0: i32) -> (i32, i32) {
    %c0_i32 = arith.constant 0 : i32
    %c0_i32_0 = arith.constant 0 : i32
    return %arg0, %c0_i32 : i32, i32
  }
  func.func @transform_1(%arg0: i32) -> (i32, i32) {
    %c0_i32 = arith.constant 0 : i32
    %c0_i32_0 = arith.constant 0 : i32
    %c0_i32_1 = arith.constant 0 : i32
    return %c0_i32, %c0_i32_0 : i32, i32
  }
  func.func @transform_2(%arg0: i32) -> (i32, i32) {
    %c0_i32 = arith.constant 0 : i32
    %c0_i32_0 = arith.constant 0 : i32
    %c0_i32_1 = arith.constant 0 : i32
    return %c0_i32, %c0_i32_0 : i32, i32
  }
  func.func @transform_3(%arg0: i32) -> (i32, i32) {
    %c0_i32 = arith.constant 0 : i32
    %c0_i32_0 = arith.constant 0 : i32
    return %arg0, %c0_i32 : i32, i32
  }
}

</mosaic_0001>

<llo_original>
// kernel: tpu_custom_call.1
$region0: #{tpu_custom_call.1}
  #allocation0 [shape = 'u32[]', space=smem, size = 0x4, offset = 0x4, fixed_abs, tag = 'smem constant byte address 0x4 - core index']
  #allocation1 [shape = 'u32[144,128]{1,0:T(1,128)}', space=vmem, size = 0x12000, scoped, tag = 'internal scratch']
  %s0 = inlined_call_operand.hbm [shape: f32[16,32], index: 0, kind: input, shape index: {}]
  %s1 = inlined_call_operand.vmem [shape: f32[1,32], index: 1, kind: input, shape index: {}]
  %s2 = inlined_call_operand.vmem [shape: f32[1,32], index: 2, kind: input, shape index: {}]
  %s3 = inlined_call_operand.hbm [shape: f32[16,32], index: 3, kind: output, shape index: {}]
  %s4 = sld [smem:[#allocation0]]
  $region26: #{tpu_custom_call.1} parent=0
    _
  %s6 = ssub.s32 1, %s4
  %s7 = scalar_select 0, %s6, %s4
  $region1: #{tpu_custom_call.1} parent=0
    #allocation2 [shape = 'u8[8192]{0}', space=vmem, size = 0x2000, scoped, tag = 'input window, operand 0, single buffered']
    #allocation3 [shape = 's32[1]{0}', space=sflag, size = 0x4, scoped, tag = 'scoped memory for tpu_custom_call.1']
    #allocation4 [shape = 's32[1]{0}', space=sflag, size = 0x4, scoped, tag = 'scoped memory for tpu_custom_call.1']
    #allocation5 [shape = 'u8[8192]{0}', space=vmem, size = 0x2000, scoped, tag = 'output window, operand 0, single buffered']
    %8 = vsyncpa [#allocation3], 0
    %9 = vsyncpa [#allocation4], 0
    // Predicated region
    $region2: #{tpu_custom_call.1} parent=1 // pred_check
      _
    $region3: #{tpu_custom_call.1} parent=1 // pred_check_branch
      %11 = sbr.rel (0) target = $region5
    $region4: #{tpu_custom_call.1} parent=1 // pred_region
      %s13 = ssub.s32 256, 256
      %14 = vsyncadd [#allocation3], %s13
      %s15 = sshll.u32 [#allocation2], 4
      %s16 = int_to_ptr.vmem [resolvable:$true] %s15
      %21 = dma.hbm_to_vmem [thread:$0]  %s0, 256, %s16, [#allocation3], 128, 128, 8
    $region5: #{tpu_custom_call.1} parent=1 // pred_fallthru
      _
    // Predicated region
    $region6: #{tpu_custom_call.1} parent=1 // pred_check
      _
    $region7: #{tpu_custom_call.1} parent=1 // pred_check_branch
      %23 = sbr.rel (0) target = $region9
    $region8: #{tpu_custom_call.1} parent=1 // pred_region
      _
    $region9: #{tpu_custom_call.1} parent=1 // pred_fallthru
      _
    // Predicated region
    $region10: #{tpu_custom_call.1} parent=1 // pred_check
      _
    $region11: #{tpu_custom_call.1} parent=1 // pred_check_branch
      %25 = sbr.rel (0) target = $region13
    $region12: #{tpu_custom_call.1} parent=1 // pred_region
      _
    $region13: #{tpu_custom_call.1} parent=1 // pred_fallthru
      _
    // Predicated region
    $region14: #{tpu_custom_call.1} parent=1 // pred_check
      _
    $region15: #{tpu_custom_call.1} parent=1 // pred_check_branch
      %27 = sbr.rel (0) target = $region17
    $region16: #{tpu_custom_call.1} parent=1 // pred_region
      %28 = dma.done [#allocation3], 256
    $region17: #{tpu_custom_call.1} parent=1 // pred_fallthru
      _
    %v29 = vld [vmem:[#allocation2] sm:$0xff]
    %v30 = vld [vmem:[#allocation2 + $0x8] sm:$0xff]
    %vm31 = vcmask 261120
    %v32 = vsel %vm31, %v29, 0.0
    %33 = vadd.xlane.f32.xlu0 %v32
    %v34 = vpop.xlane.xlu0 %33
    %v35 = vsel %vm31, %v30, 0.0
    %36 = vadd.xlane.f32.xlu0 %v35
    %v37 = vpop.xlane.xlu0 %36
    %v38 = vrcp.pop 32.0
    %v39 = vmul.f32 %v34, %v38
    %v40 = vmul.f32 %v37, %v38
    %v41 = vsub.f32 %v29, %v39
    %v42 = vsub.f32 %v30, %v40
    %v43 = vmul.f32 %v41, %v41
    %v44 = vmul.f32 %v42, %v42
    %v45 = vsel %vm31, %v43, 0.0
    %46 = vadd.xlane.f32.xlu0 %v45
    %v47 = vpop.xlane.xlu0 %46
    %v48 = vsel %vm31, %v44, 0.0
    %49 = vadd.xlane.f32.xlu0 %v48
    %v50 = vpop.xlane.xlu0 %49
    %v51 = vrcp.pop 31.0
    %v52 = vmul.f32 %v47, %v51
    %v53 = vmul.f32 %v50, %v51
    %v54 = vadd.f32 %v52, 1e-06
    %v55 = vadd.f32 %v53, 1e-06
    %v56 = vrsqrt.pop %v54
    %v57 = vrsqrt.pop %v55
    %v58 = vld [vmem:[%s1] sm:$0x1]
    %v59 = vmul.f32 %v41, %v56
    %v60 = vmul.f32 %v42, %v57
    %v62 = vlaneseq
    %v63 = vshrl.u32 %v62, 7
    %v64 = vsub.s32 0, %v63
    %v65 = vrot.slane %v58, %v64
    %v67 = vmul.f32 %v65, %v59
    %v68 = vmul.f32 %v65, %v60
    %v69 = vld [vmem:[%s2] sm:$0x1]
    %v71 = vlaneseq
    %v72 = vshrl.u32 %v71, 7
    %v73 = vsub.s32 0, %v72
    %v74 = vrot.slane %v69, %v73
    %v76 = vadd.f32 %v67, %v74
    %v77 = vadd.f32 %v68, %v74
    %78 = vst.msk [vmem:[#allocation5] sm:$0xff] %vm31, %v76
    %79 = vst.msk [vmem:[#allocation5 + $0x8] sm:$0xff] %vm31, %v77
    // Predicated region
    $region18: #{tpu_custom_call.1} parent=1 // pred_check
      _
    $region19: #{tpu_custom_call.1} parent=1 // pred_check_branch
      %81 = sbr.rel (0) target = $region21
    $region20: #{tpu_custom_call.1} parent=1 // pred_region
      %s83 = ssub.s32 256, 256
      %84 = vsyncadd [#allocation4], %s83
      %s85 = sshll.u32 [#allocation5], 4
      %s86 = int_to_ptr.vmem [resolvable:$true] %s85
      %91 = dma.vmem_to_hbm [thread:$0]  %s86, 256, %s3, [#allocation4], 128, 128, 8
    $region21: #{tpu_custom_call.1} parent=1 // pred_fallthru
      _
    // Predicated region
    $region22: #{tpu_custom_call.1} parent=1 // pred_check
      _
    $region23: #{tpu_custom_call.1} parent=1 // pred_check_branch
      %93 = sbr.rel (0) target = $region25
    $region24: #{tpu_custom_call.1} parent=1 // pred_region
      %94 = dma.done [#allocation4], 256
    $region25: #{tpu_custom_call.1} parent=1 // pred_fallthru
      _
    %95 = vsyncpa [#allocation3], 1
    %96 = vsyncpa [#allocation4], 1

</llo_original>
